<compile_context>
chip_gen: v5e
topology: v5e:2x2
jax: 0.10.0
libtpu: 0.0.40
codegen_flags: <defaults>
</compile_context>

<pallas_src>
import math

import jax
import jax.numpy as jnp
from jax.experimental import pallas as pl
from jax.experimental.pallas import tpu as pltpu


def _round_up(x, m):
    return (x + m - 1) // m * m


# ---------------------------------------------------------------------------
# Pallas kernel: one grid step == one (batch-tile, layer, timestep)
# ---------------------------------------------------------------------------
def stacked_gru_kernel(x_ref, h0_ref, wih_ref, whh_ref, bi_ref, bhn_ref,
                       out_ref, hfin_ref, act_scr):
    """Layer-major GRU step.

    Grid order is (batch_tile, layer, time): the per-layer weight blocks have a
    constant index over the inner time axis, so they stay VMEM-resident for the
    whole time loop and are DMA'd once per layer.
    """
    l = pl.program_id(1)
    t = pl.program_id(2)
    Hp = hfin_ref.shape[-1]                      # padded hidden width, %128 == 0
    num_layers = pl.num_programs(1)

    # Start of this layer's time loop: load the initial hidden state into the
    # resident h_final output block, which doubles as the recurrent carry.
    @pl.when(t == 0)
    def _():
        hfin_ref[...] = h0_ref[...]

    # Layer 0 consumes the external input feed for step t; deeper layers read
    # the activation carry written by layer l-1 at the same t.  (Copying the
    # whole K_pad-wide tile keeps the tail columns finite, so the zero weight
    # rows of layers > 0 multiply finite data.)
    @pl.when(l == 0)
    def _():
        act_scr[t] = x_ref[...]

    x = act_scr[t]                               # (Bt, K_pad), weight dtype
    h = hfin_ref[...]                            # (Bt, H_pad), fp32

    w_dt = wih_ref.dtype                         # bf16 weights, fp32 accumulate
    gi = jnp.dot(x, wih_ref[...],
                 preferred_element_type=jnp.float32) + bi_ref[...]
    gh = jnp.dot(h.astype(w_dt), whh_ref[...],
                 preferred_element_type=jnp.float32)

    # 128-lane aligned gate slices; PyTorch nn.GRUCell gate order [r, z, n].
    i_r, i_z, i_n = gi[:, :Hp], gi[:, Hp:2 * Hp], gi[:, 2 * Hp:]
    h_r, h_z, h_n = gh[:, :Hp], gh[:, Hp:2 * Hp], gh[:, 2 * Hp:]

    r = jax.nn.sigmoid(i_r + h_r)                # r/z biases pre-fused into gi
    z = jax.nn.sigmoid(i_z + h_z)
    n = jnp.tanh(i_n + r * (h_n + bhn_ref[...]))

    h_new = (1.0 - z) * n + z * h                # fp32

    hfin_ref[...] = h_new                        # recurrent carry / final state
    out_ref[...] = h_new                         # last layer's writeback wins
    # TODO(synk): training-mode dropout between layers would mask h_new here.

    # Carry this layer's output as layer l+1's input at time t.  Columns
    # [Hp:K_pad] keep layer-0 input data, which is harmless because W_ih rows
    # >= in_size are zero-padded for layers > 0.
    @pl.when(l + 1 < num_layers)
    def _():
        act_scr[t, :, :Hp] = h_new.astype(act_scr.dtype)


# ---------------------------------------------------------------------------
# Parameter construction / packing
# ---------------------------------------------------------------------------
def init_stacked_gru_params(key, num_layers, input_size, rnn_size,
                            dtype=jnp.float32):
    """nn.GRUCell-shaped params (uniform(-1/sqrt(H), 1/sqrt(H)), transposed)."""
    params = []
    bound = 1.0 / math.sqrt(rnn_size)
    in_sz = input_size
    for _ in range(num_layers):
        key, k1, k2, k3, k4 = jax.random.split(key, 5)
        w_ih_t = jax.random.uniform(k1, (in_sz, 3 * rnn_size), dtype, -bound, bound)
        w_hh_t = jax.random.uniform(k2, (rnn_size, 3 * rnn_size), dtype, -bound, bound)
        b_ih = jax.random.uniform(k3, (1, 3 * rnn_size), dtype, -bound, bound)
        b_hh = jax.random.uniform(k4, (1, 3 * rnn_size), dtype, -bound, bound)
        params.append((w_ih_t, w_hh_t, b_ih, b_hh))
        in_sz = rnn_size
    return params


def pack_stacked_gru_params(params, input_size, rnn_size,
                            weight_dtype=jnp.bfloat16):
    """Stack + pad all layers into lane-aligned arrays with fused r/z biases."""
    L = len(params)
    H = rnn_size
    H_pad = _round_up(H, 128)
    I_pad = _round_up(input_size, 128)
    K_pad = max(I_pad, H_pad)
    # TODO(synk): when input_size > rnn_size, layers > 0 still span K_pad rows
    # of zero weights (wasted DMA/MXU on L-1 layers); split layer 0 out if
    # that case matters.

    wih = jnp.zeros((L, K_pad, 3 * H_pad), jnp.float32)
    whh = jnp.zeros((L, H_pad, 3 * H_pad), jnp.float32)
    b_i = jnp.zeros((L, 1, 3 * H_pad), jnp.float32)
    b_hn = jnp.zeros((L, 1, H_pad), jnp.float32)

    for l, (w_ih_t, w_hh_t, b_ih, b_hh) in enumerate(params):
        in_sz = w_ih_t.shape[0]
        for g in range(3):
            wih = wih.at[l, :in_sz, g * H_pad:g * H_pad + H].set(
                w_ih_t[:, g * H:(g + 1) * H].astype(jnp.float32))
            whh = whh.at[l, :H, g * H_pad:g * H_pad + H].set(
                w_hh_t[:, g * H:(g + 1) * H].astype(jnp.float32))
        # Fused biases: r and z gates get b_ih + b_hh; n gate keeps b_ih here
        # and b_hh separately (it sits inside r * (W_hn h + b_hn)).
        b_i = b_i.at[l, 0, 0 * H_pad:0 * H_pad + H].set(
            (b_ih[0, 0 * H:1 * H] + b_hh[0, 0 * H:1 * H]).astype(jnp.float32))
        b_i = b_i.at[l, 0, 1 * H_pad:1 * H_pad + H].set(
            (b_ih[0, 1 * H:2 * H] + b_hh[0, 1 * H:2 * H]).astype(jnp.float32))
        b_i = b_i.at[l, 0, 2 * H_pad:2 * H_pad + H].set(
            b_ih[0, 2 * H:3 * H].astype(jnp.float32))
        b_hn = b_hn.at[l, 0, :H].set(b_hh[0, 2 * H:3 * H].astype(jnp.float32))

    return {
        "wih": wih.astype(weight_dtype),
        "whh": whh.astype(weight_dtype),
        "b_i": b_i,
        "b_hn": b_hn,
        "num_layers": L,
        "rnn_size": H,
        "input_size": input_size,
        "H_pad": H_pad,
        "K_pad": K_pad,
    }


# ---------------------------------------------------------------------------
# Multi-step decode: T chained StackedGRU.forward steps in ONE pallas_call
# ---------------------------------------------------------------------------
def stacked_gru_decode(packed, input_seq, hidden):
    """Runs T chained StackedGRU.forward steps (eval mode).

    input_seq: (T, B, input_size)   input feed of each decode step
    hidden:    (h0,) with h0 of shape (num_layers, B, rnn_size)
    returns:   (outputs (T, B, rnn_size), (h_T (num_layers, B, rnn_size),))
    """
    (h0,) = hidden
    T, B, I = input_seq.shape
    L = packed["num_layers"]
    H = packed["rnn_size"]
    H_pad = packed["H_pad"]
    K_pad = packed["K_pad"]
    wih, whh, b_i, b_hn = packed["wih"], packed["whh"], packed["b_i"], packed["b_hn"]
    w_dt = wih.dtype
    w_bytes = jnp.dtype(w_dt).itemsize

    B_pad = _round_up(max(B, 1), 8)              # full fp32 sublane group
    # 2-way batch split across TensorCores (v7x megacore) when it stays
    # sublane-aligned; degenerate (1) for small batches.
    nb = 2 if (B_pad >= 16 and B_pad % 16 == 0) else 1
    Bt = B_pad // nb

    # Pad once per call (amortised over all T steps).  The input feed / carry
    # stays in the weight dtype (it is cast for the matmul anyway).
    x_seq = jnp.zeros((T, B_pad, K_pad), w_dt)
    x_seq = x_seq.at[:, :B, :I].set(input_seq.astype(w_dt))
    h0p = jnp.zeros((L, B_pad, H_pad), jnp.float32)
    h0p = h0p.at[:, :B, :H].set(h0.astype(jnp.float32))

    # Advisory cost estimate for XLA's scheduler.
    flops = (2 * T * L * B_pad * (K_pad + H_pad) * 3 * H_pad
             + 12 * T * L * B_pad * H_pad)
    transcendentals = 3 * T * L * B_pad * H_pad
    bytes_accessed = (nb * (wih.nbytes + whh.nbytes + b_i.nbytes + b_hn.nbytes)
                      + x_seq.nbytes + h0p.nbytes
                      + (T + L) * B_pad * H_pad * 4)

    # VMEM: double-buffered per-(layer|step) blocks + T-deep activation carry
    # scratch + headroom for compiler-internal scratch.  Computed from actual
    # need (no blanket 64 MiB request) so v7x (64 MiB/TC) keeps slack.
    need = (2 * Bt * K_pad * w_bytes                       # x_seq blocks
            + 2 * (K_pad + H_pad) * 3 * H_pad * w_bytes    # wih + whh blocks
            + 2 * 8 * (3 * H_pad + H_pad) * 4              # bias blocks (sublane-padded)
            + 6 * Bt * H_pad * 4                           # h0 / out / h_final blocks
            + T * Bt * K_pad * w_bytes)                    # activation carry scratch
    vmem_limit = int(max(need + (4 << 20), 16 << 20))

    out_seq_p, h_final_p = pl.pallas_call(
        stacked_gru_kernel,
        out_shape=(jax.ShapeDtypeStruct((T, B_pad, H_pad), jnp.float32),
                   jax.ShapeDtypeStruct((L, B_pad, H_pad), jnp.float32)),
        grid=(nb, L, T),
        in_specs=[
            # Input feed: only layer 0 reads it; constant block index for l>0
            # keeps the (unused) block from re-streaming every inner step.
            pl.BlockSpec((None, Bt, K_pad),
                         lambda b, l, t: (jnp.where(l == 0, t, 0), b, 0)),
            pl.BlockSpec((None, Bt, H_pad), lambda b, l, t: (l, b, 0)),       # h0[l]
            # Per-layer weights/biases: constant over the inner time axis, so
            # they are DMA'd once per layer and stay VMEM-resident for all T.
            pl.BlockSpec((None, K_pad, 3 * H_pad), lambda b, l, t: (l, 0, 0)),
            pl.BlockSpec((None, H_pad, 3 * H_pad), lambda b, l, t: (l, 0, 0)),
            pl.BlockSpec((None, 1, 3 * H_pad), lambda b, l, t: (l, 0, 0)),
            pl.BlockSpec((None, 1, H_pad), lambda b, l, t: (l, 0, 0)),
        ],
        out_specs=(
            pl.BlockSpec((None, Bt, H_pad), lambda b, l, t: (t, b, 0)),       # per-step out
            pl.BlockSpec((None, Bt, H_pad), lambda b, l, t: (l, b, 0)),       # final hidden
        ),
        scratch_shapes=[pltpu.VMEM((T, Bt, K_pad), w_dt)],    # inter-layer carry
        input_output_aliases={1: 1},                          # h0p -> h_final in place
        compiler_params=pltpu.CompilerParams(
            dimension_semantics=("parallel", "arbitrary", "arbitrary"),
            vmem_limit_bytes=vmem_limit),
        cost_estimate=pl.CostEstimate(
            flops=int(flops),
            transcendentals=int(transcendentals),
            bytes_accessed=int(bytes_accessed)),
    )(x_seq, h0p, wih, whh, b_i, b_hn)

    out_seq = out_seq_p[:, :B, :H].astype(input_seq.dtype)
    h_final = h_final_p[:, :B, :H].astype(input_seq.dtype)
    return out_seq, (h_final,)


def stacked_gru_forward(packed, input_feed, hidden):
    """Mirrors StackedGRU.forward (eval mode) for a single decode step.

    input_feed: (B, input_size)
    hidden:     (h0,) with h0 of shape (num_layers, B, rnn_size)
    returns:    (output (B, rnn_size), (h_1 (num_layers, B, rnn_size),))
    """
    out_seq, (h_1,) = stacked_gru_decode(packed, input_feed[None], hidden)
    return out_seq[0], (h_1,)


# ---------------------------------------------------------------------------
# Pure-JAX reference (same bf16 weight / fp32 accumulate numerics)
# ---------------------------------------------------------------------------
def gru_cell_ref(x, h, w_ih_t, w_hh_t, b_ih, b_hh, weight_dtype):
    H = h.shape[-1]
    gi = jnp.dot(x.astype(weight_dtype), w_ih_t.astype(weight_dtype),
                 preferred_element_type=jnp.float32) + b_ih
    gh = jnp.dot(h.astype(weight_dtype), w_hh_t.astype(weight_dtype),
                 preferred_element_type=jnp.float32) + b_hh
    r = jax.nn.sigmoid(gi[:, :H] + gh[:, :H])
    z = jax.nn.sigmoid(gi[:, H:2 * H] + gh[:, H:2 * H])
    n = jnp.tanh(gi[:, 2 * H:] + r * gh[:, 2 * H:])
    return (1.0 - z) * n + z * h


def stacked_gru_ref(params, input_feed, hidden, weight_dtype=jnp.bfloat16):
    (h0,) = hidden
    h_1 = []
    x = input_feed.astype(jnp.float32)
    for i, p in enumerate(params):
        x = gru_cell_ref(x, h0[i].astype(jnp.float32), *p,
                         weight_dtype=weight_dtype)
        h_1.append(x)
    return x, (jnp.stack(h_1),)


def stacked_gru_decode_ref(params, input_seq, hidden, weight_dtype=jnp.bfloat16):
    h = hidden
    outs = []
    for t in range(input_seq.shape[0]):
        out, h = stacked_gru_ref(params, input_seq[t], h,
                                 weight_dtype=weight_dtype)
        outs.append(out)
    return jnp.stack(outs), h


if __name__ == "__main__":
    num_layers = 2
    input_size = 32
    rnn_size = 32
    batch = 2
    seq_len = 4

    key = jax.random.PRNGKey(0)
    kp, kx, kh = jax.random.split(key, 3)

    params = init_stacked_gru_params(kp, num_layers, input_size, rnn_size)
    packed = pack_stacked_gru_params(params, input_size, rnn_size,
                                     weight_dtype=jnp.bfloat16)

    input_seq = jax.random.normal(kx, (seq_len, batch, input_size), jnp.float32)
    h0 = jax.random.normal(kh, (num_layers, batch, rnn_size), jnp.float32)

    # --- Single-step forward (exact module semantics) ---
    out1, (h1,) = stacked_gru_forward(packed, input_seq[0], (h0,))
    out1 = jax.block_until_ready(out1)
    h1 = jax.block_until_ready(h1)
    ref_out1, (ref_h1,) = stacked_gru_ref(params, input_seq[0], (h0,))
    assert out1.shape == (batch, rnn_size)
    assert h1.shape == (num_layers, batch, rnn_size)
    assert jnp.allclose(out1, ref_out1, atol=1e-2, rtol=1e-2), \
        float(jnp.max(jnp.abs(out1 - ref_out1)))
    assert jnp.allclose(h1, ref_h1, atol=1e-2, rtol=1e-2), \
        float(jnp.max(jnp.abs(h1 - ref_h1)))

    # --- Multi-step decode: T chained forward steps fused into one call ---
    outs, (hT,) = stacked_gru_decode(packed, input_seq, (h0,))
    outs = jax.block_until_ready(outs)
    hT = jax.block_until_ready(hT)
    ref_outs, (ref_hT,) = stacked_gru_decode_ref(params, input_seq, (h0,))
    assert outs.shape == (seq_len, batch, rnn_size)
    assert hT.shape == (num_layers, batch, rnn_size)
    assert jnp.allclose(outs, ref_outs, atol=2e-2, rtol=2e-2), \
        float(jnp.max(jnp.abs(outs - ref_outs)))
    assert jnp.allclose(hT, ref_hT, atol=2e-2, rtol=2e-2), \
        float(jnp.max(jnp.abs(hT - ref_hT)))

    print("KERNEL_OK")
</pallas_src>

<mosaic_0001>
module attributes {stable_mosaic.version = 11 : i64} {
  func.func @stacked_gru_kernel(%arg0: i32, %arg1: i32, %arg2: i32, %arg3: memref<1x8x128xbf16, #tpu.memory_space<vmem>>, %arg4: memref<1x8x128xf32, #tpu.memory_space<vmem>>, %arg5: memref<1x128x384xbf16, #tpu.memory_space<vmem>>, %arg6: memref<1x128x384xbf16, #tpu.memory_space<vmem>>, %arg7: memref<1x1x384xf32, #tpu.memory_space<vmem>>, %arg8: memref<1x1x128xf32, #tpu.memory_space<vmem>>, %arg9: memref<1x8x128xf32, #tpu.memory_space<vmem>>, %arg10: memref<1x8x128xf32, #tpu.memory_space<vmem>>, %arg11: memref<1x8x128xbf16, #tpu.memory_space<vmem>>) attributes {dimension_semantics = [#tpu.dimension_semantics<parallel>, #tpu.dimension_semantics<arbitrary>, #tpu.dimension_semantics<arbitrary>], iteration_bounds = array<i64: 1, 2, 1>, scalar_prefetch = 0 : i64, scratch_operands = 1 : i64, tpu.core_type = #tpu.core_type<tc>, window_params = [{transform_indices = @transform_0, window_bounds = array<i64: 1, 8, 128>}, {transform_indices = @transform_1, window_bounds = array<i64: 1, 8, 128>}, {transform_indices = @transform_2, window_bounds = array<i64: 1, 128, 384>}, {transform_indices = @transform_3, window_bounds = array<i64: 1, 128, 384>}, {transform_indices = @transform_4, window_bounds = array<i64: 1, 1, 384>}, {transform_indices = @transform_5, window_bounds = array<i64: 1, 1, 128>}, {transform_indices = @transform_6, window_bounds = array<i64: 1, 8, 128>}, {transform_indices = @transform_7, window_bounds = array<i64: 1, 8, 128>}]} {
    %c0_i32 = arith.constant 0 : i32
    %0 = arith.cmpi eq, %arg2, %c0_i32 : i32
    %1 = arith.extui %0 : i1 to i32
    %c0_i32_0 = arith.constant 0 : i32
    %2 = arith.cmpi ne, %1, %c0_i32_0 : i32
    scf.if %2 {
      %c0_30 = arith.constant 0 : index
      %c0_31 = arith.constant 0 : index
      %c0_32 = arith.constant 0 : index
      %62 = vector.load %arg4[%c0_30, %c0_31, %c0_32] : memref<1x8x128xf32, #tpu.memory_space<vmem>>, vector<1x8x128xf32>
      %63 = vector.shape_cast %62 : vector<1x8x128xf32> to vector<8x128xf32>
      %c0_33 = arith.constant 0 : index
      %c0_34 = arith.constant 0 : index
      %c0_35 = arith.constant 0 : index
      %64 = vector.load %arg10[%c0_33, %c0_34, %c0_35] : memref<1x8x128xf32, #tpu.memory_space<vmem>>, vector<1x8x128xf32>
      %65 = vector.shape_cast %64 : vector<1x8x128xf32> to vector<8x128xf32>
      %66 = vector.shape_cast %63 : vector<8x128xf32> to vector<1x8x128xf32>
      tpu.vector_store %arg10[%c0_33, %c0_34, %c0_35], %66 {strides = array<i32>} : memref<1x8x128xf32, #tpu.memory_space<vmem>>, vector<1x8x128xf32>,
    } else {
    }
    %c0_i32_1 = arith.constant 0 : i32
    %3 = arith.cmpi eq, %arg1, %c0_i32_1 : i32
    %4 = arith.extui %3 : i1 to i32
    %c0_i32_2 = arith.constant 0 : i32
    %5 = arith.cmpi ne, %4, %c0_i32_2 : i32
    scf.if %5 {
      %c0_30 = arith.constant 0 : index
      %c0_31 = arith.constant 0 : index
      %c0_32 = arith.constant 0 : index
      %62 = vector.load %arg3[%c0_30, %c0_31, %c0_32] : memref<1x8x128xbf16, #tpu.memory_space<vmem>>, vector<1x8x128xbf16>
      %63 = vector.shape_cast %62 : vector<1x8x128xbf16> to vector<8x128xbf16>
      %64 = arith.index_cast %arg2 : i32 to index
      %c0_33 = arith.constant 0 : index
      %c0_34 = arith.constant 0 : index
      %65 = vector.load %arg11[%64, %c0_33, %c0_34] : memref<1x8x128xbf16, #tpu.memory_space<vmem>>, vector<1x8x128xbf16>
      %66 = vector.shape_cast %65 : vector<1x8x128xbf16> to vector<8x128xbf16>
      %67 = vector.shape_cast %63 : vector<8x128xbf16> to vector<1x8x128xbf16>
      tpu.vector_store %arg11[%64, %c0_33, %c0_34], %67 {strides = array<i32>} : memref<1x8x128xbf16, #tpu.memory_space<vmem>>, vector<1x8x128xbf16>,
    } else {
    }
    %6 = arith.index_cast %arg2 : i32 to index
    %c0 = arith.constant 0 : index
    %c0_3 = arith.constant 0 : index
    %7 = vector.load %arg11[%6, %c0, %c0_3] : memref<1x8x128xbf16, #tpu.memory_space<vmem>>, vector<1x8x128xbf16>
    %8 = vector.shape_cast %7 : vector<1x8x128xbf16> to vector<8x128xbf16>
    %c0_4 = arith.constant 0 : index
    %c0_5 = arith.constant 0 : index
    %c0_6 = arith.constant 0 : index
    %9 = vector.load %arg10[%c0_4, %c0_5, %c0_6] : memref<1x8x128xf32, #tpu.memory_space<vmem>>, vector<1x8x128xf32>
    %10 = vector.shape_cast %9 : vector<1x8x128xf32> to vector<8x128xf32>
    %c0_7 = arith.constant 0 : index
    %c0_8 = arith.constant 0 : index
    %c0_9 = arith.constant 0 : index
    %11 = vector.load %arg5[%c0_7, %c0_8, %c0_9] : memref<1x128x384xbf16, #tpu.memory_space<vmem>>, vector<1x128x384xbf16>
    %12 = vector.shape_cast %11 : vector<1x128x384xbf16> to vector<128x384xbf16>
    %cst = arith.constant dense<0.000000e+00> : vector<8x384xf32>
    %13 = tpu.matmul %8, %12, %cst {dimension_numbers = #tpu.dot_dimension_numbers<[1], [0], [0], [1], [0, 0, 1, 1], [], []>} : vector<8x128xbf16>, vector<128x384xbf16>, vector<8x384xf32> -> vector<8x384xf32>
    %c0_10 = arith.constant 0 : index
    %c0_11 = arith.constant 0 : index
    %c0_12 = arith.constant 0 : index
    %14 = vector.load %arg7[%c0_10, %c0_11, %c0_12] : memref<1x1x384xf32, #tpu.memory_space<vmem>>, vector<1x1x384xf32>
    %15 = vector.shape_cast %14 : vector<1x1x384xf32> to vector<1x384xf32>
    %16 = vector.broadcast %15 : vector<1x384xf32> to vector<8x384xf32>
    %17 = arith.addf %13, %16 : vector<8x384xf32>
    %18 = arith.truncf %10 : vector<8x128xf32> to vector<8x128xbf16>
    %c0_13 = arith.constant 0 : index
    %c0_14 = arith.constant 0 : index
    %c0_15 = arith.constant 0 : index
    %19 = vector.load %arg6[%c0_13, %c0_14, %c0_15] : memref<1x128x384xbf16, #tpu.memory_space<vmem>>, vector<1x128x384xbf16>
    %20 = vector.shape_cast %19 : vector<1x128x384xbf16> to vector<128x384xbf16>
    %cst_16 = arith.constant dense<0.000000e+00> : vector<8x384xf32>
    %21 = tpu.matmul %18, %20, %cst_16 {dimension_numbers = #tpu.dot_dimension_numbers<[1], [0], [0], [1], [0, 0, 1, 1], [], []>} : vector<8x128xbf16>, vector<128x384xbf16>, vector<8x384xf32> -> vector<8x384xf32>
    %22 = vector.extract_strided_slice %17 {offsets = [0, 0], sizes = [8, 128], strides = [1, 1]} : vector<8x384xf32> to vector<8x128xf32>
    %23 = vector.extract_strided_slice %17 {offsets = [0, 128], sizes = [8, 128], strides = [1, 1]} : vector<8x384xf32> to vector<8x128xf32>
    %24 = vector.extract_strided_slice %17 {offsets = [0, 256], sizes = [8, 128], strides = [1, 1]} : vector<8x384xf32> to vector<8x128xf32>
    %25 = vector.extract_strided_slice %21 {offsets = [0, 0], sizes = [8, 128], strides = [1, 1]} : vector<8x384xf32> to vector<8x128xf32>
    %26 = vector.extract_strided_slice %21 {offsets = [0, 128], sizes = [8, 128], strides = [1, 1]} : vector<8x384xf32> to vector<8x128xf32>
    %27 = vector.extract_strided_slice %21 {offsets = [0, 256], sizes = [8, 128], strides = [1, 1]} : vector<8x384xf32> to vector<8x128xf32>
    %28 = arith.addf %22, %25 : vector<8x128xf32>
    %29 = arith.negf %28 : vector<8x128xf32>
    %30 = math.exp %29 : vector<8x128xf32>
    %cst_17 = arith.constant 1.000000e+00 : f32
    %31 = vector.broadcast %cst_17 : f32 to vector<8x128xf32>
    %32 = arith.addf %31, %30 : vector<8x128xf32>
    %33 = arith.divf %31, %32 : vector<8x128xf32>
    %34 = arith.addf %23, %26 : vector<8x128xf32>
    %35 = arith.negf %34 : vector<8x128xf32>
    %36 = math.exp %35 : vector<8x128xf32>
    %cst_18 = arith.constant 1.000000e+00 : f32
    %37 = vector.broadcast %cst_18 : f32 to vector<8x128xf32>
    %38 = arith.addf %37, %36 : vector<8x128xf32>
    %39 = arith.divf %37, %38 : vector<8x128xf32>
    %c0_19 = arith.constant 0 : index
    %c0_20 = arith.constant 0 : index
    %c0_21 = arith.constant 0 : index
    %40 = vector.load %arg8[%c0_19, %c0_20, %c0_21] : memref<1x1x128xf32, #tpu.memory_space<vmem>>, vector<1x1x128xf32>
    %41 = vector.shape_cast %40 : vector<1x1x128xf32> to vector<1x128xf32>
    %42 = vector.broadcast %41 : vector<1x128xf32> to vector<8x128xf32>
    %43 = arith.addf %27, %42 : vector<8x128xf32>
    %44 = arith.mulf %33, %43 : vector<8x128xf32>
    %45 = arith.addf %24, %44 : vector<8x128xf32>
    %46 = math.tanh %45 : vector<8x128xf32>
    %cst_22 = arith.constant 1.000000e+00 : f32
    %47 = vector.broadcast %cst_22 : f32 to vector<8x128xf32>
    %48 = arith.subf %47, %39 : vector<8x128xf32>
    %49 = arith.mulf %48, %46 : vector<8x128xf32>
    %50 = arith.mulf %39, %10 : vector<8x128xf32>
    %51 = arith.addf %49, %50 : vector<8x128xf32>
    %c0_23 = arith.constant 0 : index
    %c0_24 = arith.constant 0 : index
    %c0_25 = arith.constant 0 : index
    %52 = vector.load %arg10[%c0_23, %c0_24, %c0_25] : memref<1x8x128xf32, #tpu.memory_space<vmem>>, vector<1x8x128xf32>
    %53 = vector.shape_cast %52 : vector<1x8x128xf32> to vector<8x128xf32>
    %54 = vector.shape_cast %51 : vector<8x128xf32> to vector<1x8x128xf32>
    tpu.vector_store %arg10[%c0_23, %c0_24, %c0_25], %54 {strides = array<i32>} : memref<1x8x128xf32, #tpu.memory_space<vmem>>, vector<1x8x128xf32>,
    %c0_26 = arith.constant 0 : index
    %c0_27 = arith.constant 0 : index
    %c0_28 = arith.constant 0 : index
    %55 = vector.load %arg9[%c0_26, %c0_27, %c0_28] : memref<1x8x128xf32, #tpu.memory_space<vmem>>, vector<1x8x128xf32>
    %56 = vector.shape_cast %55 : vector<1x8x128xf32> to vector<8x128xf32>
    %57 = vector.shape_cast %51 : vector<8x128xf32> to vector<1x8x128xf32>
    tpu.vector_store %arg9[%c0_26, %c0_27, %c0_28], %57 {strides = array<i32>} : memref<1x8x128xf32, #tpu.memory_space<vmem>>, vector<1x8x128xf32>,
    %c1_i32 = arith.constant 1 : i32
    %58 = arith.addi %arg1, %c1_i32 : i32
    %c2_i32 = arith.constant 2 : i32
    %59 = arith.cmpi slt, %58, %c2_i32 : i32
    %60 = arith.extui %59 : i1 to i32
    %c0_i32_29 = arith.constant 0 : i32
    %61 = arith.cmpi ne, %60, %c0_i32_29 : i32
    scf.if %61 {
      %62 = arith.truncf %51 : vector<8x128xf32> to vector<8x128xbf16>
      %63 = arith.index_cast %arg2 : i32 to index
      %c0_30 = arith.constant 0 : index
      %c0_31 = arith.constant 0 : index
      %64 = vector.load %arg11[%63, %c0_30, %c0_31] : memref<1x8x128xbf16, #tpu.memory_space<vmem>>, vector<1x8x128xbf16>
      %65 = vector.shape_cast %64 : vector<1x8x128xbf16> to vector<8x128xbf16>
      %66 = vector.shape_cast %62 : vector<8x128xbf16> to vector<1x8x128xbf16>
      tpu.vector_store %arg11[%63, %c0_30, %c0_31], %66 {strides = array<i32>} : memref<1x8x128xbf16, #tpu.memory_space<vmem>>, vector<1x8x128xbf16>,
    } else {
    }
    return
  }
  func.func @transform_0(%arg0: i32, %arg1: i32, %arg2: i32) -> (i32, i32, i32) {
    %c0_i32 = arith.constant 0 : i32
    %0 = arith.cmpi eq, %arg1, %c0_i32 : i32
    %c0_i32_0 = arith.constant 0 : i32
    %1 = arith.select %0, %arg2, %c0_i32_0 : i32
    %c0_i32_1 = arith.constant 0 : i32
    %c0_i32_2 = arith.constant 0 : i32
    return %1, %arg0, %c0_i32_1 : i32, i32, i32
  }
  func.func @transform_1(%arg0: i32, %arg1: i32, %arg2: i32) -> (i32, i32, i32) {
    %c0_i32 = arith.constant 0 : i32
    %c0_i32_0 = arith.constant 0 : i32
    return %arg1, %arg0, %c0_i32 : i32, i32, i32
  }
  func.func @transform_2(%arg0: i32, %arg1: i32, %arg2: i32) -> (i32, i32, i32) {
    %c0_i32 = arith.constant 0 : i32
    %c0_i32_0 = arith.constant 0 : i32
    %c0_i32_1 = arith.constant 0 : i32
    return %arg1, %c0_i32, %c0_i32_0 : i32, i32, i32
  }
  func.func @transform_3(%arg0: i32, %arg1: i32, %arg2: i32) -> (i32, i32, i32) {
    %c0_i32 = arith.constant 0 : i32
    %c0_i32_0 = arith.constant 0 : i32
    %c0_i32_1 = arith.constant 0 : i32
    return %arg1, %c0_i32, %c0_i32_0 : i32, i32, i32
  }
  func.func @transform_4(%arg0: i32, %arg1: i32, %arg2: i32) -> (i32, i32, i32) {
    %c0_i32 = arith.constant 0 : i32
    %c0_i32_0 = arith.constant 0 : i32
    %c0_i32_1 = arith.constant 0 : i32
    return %arg1, %c0_i32, %c0_i32_0 : i32, i32, i32
  }
  func.func @transform_5(%arg0: i32, %arg1: i32, %arg2: i32) -> (i32, i32, i32) {
    %c0_i32 = arith.constant 0 : i32
    %c0_i32_0 = arith.constant 0 : i32
    %c0_i32_1 = arith.constant 0 : i32
    return %arg1, %c0_i32, %c0_i32_0 : i32, i32, i32
  }
  func.func @transform_6(%arg0: i32, %arg1: i32, %arg2: i32) -> (i32, i32, i32) {
    %c0_i32 = arith.constant 0 : i32
    %c0_i32_0 = arith.constant 0 : i32
    return %arg2, %arg0, %c0_i32 : i32, i32, i32
  }
  func.func @transform_7(%arg0: i32, %arg1: i32, %arg2: i32) -> (i32, i32, i32) {
    %c0_i32 = arith.constant 0 : i32
    %c0_i32_0 = arith.constant 0 : i32
    return %arg1, %arg0, %c0_i32 : i32, i32, i32
  }
}

</mosaic_0001>

<llo_original>
// kernel: tpu_custom_call.1
$region0: #{tpu_custom_call.1}
  #allocation0 [shape = 'u32[]', space=smem, size = 0x4, offset = 0x4, fixed_abs, tag = 'smem constant byte address 0x4 - core index']
  #allocation1 [shape = 'u32[72,128]{1,0:T(1,128)}', space=vmem, size = 0x9000, scoped, tag = 'internal scratch']
  #allocation2 [shape = 'bf16[1,8,128]{2,1,0:T(8,128)(2,1)}', space=vmem, size = 0x800, scoped, tag = 'scratch operand']
  %s0 = inlined_call_operand.vmem [shape: bf16[1,8,128], index: 0, kind: input, shape index: {}]
  %s1 = inlined_call_operand.hbm [shape: f32[2,8,128], index: 1, kind: input, shape index: {}, may-alias: {1,7}]
  %s2 = inlined_call_operand.hbm [shape: bf16[2,128,384], index: 2, kind: input, shape index: {}]
  %s3 = inlined_call_operand.hbm [shape: bf16[2,128,384], index: 3, kind: input, shape index: {}]
  %s4 = inlined_call_operand.vmem [shape: f32[2,1,384], index: 4, kind: input, shape index: {}]
  %s5 = inlined_call_operand.vmem [shape: f32[2,1,128], index: 5, kind: input, shape index: {}]
  %s6 = inlined_call_operand.hbm [shape: f32[1,8,128], index: 6, kind: output, shape index: {0}]
  %s7 = inlined_call_operand.hbm [shape: f32[2,8,128], index: 7, kind: output, shape index: {1}, may-alias: {1,7}]
  %8 = xla_tuple %s6, %s7
  %s9 = sld [smem:[#allocation0]]
  $region89: #{tpu_custom_call.1} parent=0
    _
  %s11 = ssub.s32 1, %s9
  %s12 = scalar_select 0, %s11, %s9
  $region1: #{tpu_custom_call.1} parent=0
    #allocation3 [shape = 'u8[8192]{0}', space=vmem, size = 0x2000, scoped, tag = 'input window, operand 1']
    #allocation4 [shape = 's32[2]{0}', space=sflag, size = 0x8, scoped, tag = 'scoped memory for tpu_custom_call.1']
    #allocation5 [shape = 's32[2]{0}', space=sflag, size = 0x8, scoped, tag = 'scoped memory for tpu_custom_call.1']
    #allocation6 [shape = 'u8[196608]{0}', space=vmem, size = 0x30000, scoped, tag = 'input window, operand 2']
    #allocation7 [shape = 's32[2]{0}', space=sflag, size = 0x8, scoped, tag = 'scoped memory for tpu_custom_call.1']
    #allocation8 [shape = 'u8[196608]{0}', space=vmem, size = 0x30000, scoped, tag = 'input window, operand 3']
    #allocation9 [shape = 'u8[4096]{0}', space=vmem, size = 0x1000, scoped, tag = 'output window, operand 0, single buffered']
    #allocation10 [shape = 'u8[8192]{0}', space=vmem, size = 0x2000, scoped, tag = 'output window, operand 1']
    #allocation11 [shape = 's32[2]{0}', space=sflag, size = 0x8, scoped, tag = 'scoped memory for tpu_custom_call.1']
    %13 = vsyncpa [#allocation4], 0
    %s14 = scalar_lea.sflag [#allocation4], 1
    %15 = vsyncpa %s14, 0
    %16 = vsyncpa [#allocation7], 0
    %s17 = scalar_lea.sflag [#allocation7], 1
    %18 = vsyncpa %s17, 0
    %19 = vsyncpa [#allocation5], 0
    %20 = vsyncpa [#allocation11], 0
    %s21 = scalar_lea.sflag [#allocation11], 1
    %22 = vsyncpa %s21, 0
    loop: start=0, step=1, limit=4
    $region2: #{tpu_custom_call.1} parent=1 // loop_pre_header
      _
    $region3: #{tpu_custom_call.1} parent=1 // loop_header
      %s24 = sphi 0, %s28
      %p25 = scmp.ge.s32.totalorder %s24, 4
      %s31 = sphi 0, %s50
      %s32 = sphi 0, %s46
      %s33 = sphi 0, %s42
      %s34 = sphi 0, %s31
      %s35 = sphi 0, %s32
      %s36 = sphi 0, %s33
      %s37 = sphi 0, %s34
      %s38 = sphi 0, %s35
      %s39 = sphi 0, %s36
      %s59 = sphi 0, %s61
      %s62 = sphi 0, %s59
      %s63 = sphi 0, %s62
      %s79 = sphi 0, %s63
      %s87 = sphi 0, %s89
      %s90 = sphi 0, %s87
      %s91 = sphi 0, %s90
      %s107 = sphi 0, %s91
      %s113 = sphi 0, %s115
      %s116 = sphi 0, %s113
      %s117 = sphi 0, %s116
      %s133 = sphi 0, %s117
      %s139 = sphi 0, %s141
      %s142 = sphi 0, %s139
      %s143 = sphi 0, %s142
      %s159 = sphi 0, %s143
      %s165 = sphi 0, %s167
      %s168 = sphi 0, %s165
      %s169 = sphi 0, %s168
      %s185 = sphi 0, %s169
      %s191 = sphi 0, %s193
      %s194 = sphi 0, %s191
      %s195 = sphi 0, %s194
      %s211 = sphi 0, %s195
      %s219 = sphi 0, %s221
      %s222 = sphi 0, %s219
      %s223 = sphi 0, %s222
      %s239 = sphi 0, %s223
      %s247 = sphi 0, %s249
      %s250 = sphi 0, %s247
      %s251 = sphi 0, %s250
      %s267 = sphi 0, %s251
    $region4: #{tpu_custom_call.1} parent=1 // loop_header_branch
      %27 = sbr.rel (%p25) target = $region8
    $region5: #{tpu_custom_call.1} parent=1 // loop_body
      %s29 = ssub.s32 %s24, 1
      %s30 = ssub.s32 %s24, 2
      %s40 = sadd.s32 1, %s33
      %p41 = scmp.ge.s32.totalorder %s40, 1
      %s42 = scalar_select %p41, 0, %s40
      %s43 = sadd.s32 1, %s32
      %s44 = scalar_select %p41, %s43, %s32
      %p45 = scmp.ge.s32.totalorder %s44, 2
      %s46 = scalar_select %p45, 0, %s44
      %s47 = sadd.s32 1, %s31
      %s48 = scalar_select %p45, %s47, %s31
      %p49 = scmp.ge.s32.totalorder %s48, 1
      %s50 = scalar_select %p49, 0, %s48
      %p51 = scmp.eq.s32.totalorder %s32, 0
      %s52 = scalar_select %p51, %s33, 0
      %p53 = scmp.eq.s32.totalorder %s46, 0
      %s54 = scalar_select %p53, %s42, 0
      %s55 = ssub.s32 %s52, %s54
      %s56 = ssub.s32 %s31, %s50
      %s57 = sor.u32 %s55, %s56
      %p58 = scmp.eq.s32.totalorder %s57, 0
      %s60 = sadd.s32 %s59, 1
      %s61 = scalar_select %p58, %s59, %s60
      %p64 = pneg %p58
      %p65 = scmp.eq.s32.totalorder %s24, 1
      %p66 = por %p64, %p65
      %p67 = scmp.ne.s32.totalorder %s59, %s62
      %p68 = scmp.eq.s32.totalorder %s24, 0
      %p69 = por %p67, %p68
      %p70 = scmp.ne.s32.totalorder %s59, %s62
      %p71 = scmp.eq.s32.totalorder %s29, 1
      %p72 = por %p70, %p71
      %p73 = scmp.ne.s32.totalorder %s62, %s63
      %p74 = scmp.eq.s32.totalorder %s29, 0
      %p75 = por %p73, %p74
      %p76 = scmp.ne.s32.totalorder %s62, %s63
      %p77 = scmp.eq.s32.totalorder %s30, 1
      %p78 = por %p76, %p77
      %p80 = scmp.ne.s32.totalorder %s63, %s79
      %p81 = scmp.eq.s32.totalorder %s30, 0
      %p82 = por %p80, %p81
      %s83 = ssub.s32 %s32, %s46
      %s84 = ssub.s32 %s31, %s50
      %s85 = sor.u32 %s83, %s84
      %p86 = scmp.eq.s32.totalorder %s85, 0
      %s88 = sadd.s32 %s87, 1
      %s89 = scalar_select %p86, %s87, %s88
      %p92 = pneg %p86
      %p93 = scmp.eq.s32.totalorder %s24, 1
      %p94 = por %p92, %p93
      %p95 = scmp.ne.s32.totalorder %s87, %s90
      %p96 = scmp.eq.s32.totalorder %s24, 0
      %p97 = por %p95, %p96
      %p98 = scmp.ne.s32.totalorder %s87, %s90
      %p99 = scmp.eq.s32.totalorder %s29, 1
      %p100 = por %p98, %p99
      %p101 = scmp.ne.s32.totalorder %s90, %s91
      %p102 = scmp.eq.s32.totalorder %s29, 0
      %p103 = por %p101, %p102
      %p104 = scmp.ne.s32.totalorder %s90, %s91
      %p105 = scmp.eq.s32.totalorder %s30, 1
      %p106 = por %p104, %p105
      %p108 = scmp.ne.s32.totalorder %s91, %s107
      %p109 = scmp.eq.s32.totalorder %s30, 0
      %p110 = por %p108, %p109
      %s111 = ssub.s32 %s32, %s46
      %p112 = scmp.eq.s32.totalorder %s111, 0
      %s114 = sadd.s32 %s113, 1
      %s115 = scalar_select %p112, %s113, %s114
      %p118 = pneg %p112
      %p119 = scmp.eq.s32.totalorder %s24, 1
      %p120 = por %p118, %p119
      %p121 = scmp.ne.s32.totalorder %s113, %s116
      %p122 = scmp.eq.s32.totalorder %s24, 0
      %p123 = por %p121, %p122
      %p124 = scmp.ne.s32.totalorder %s113, %s116
      %p125 = scmp.eq.s32.totalorder %s29, 1
      %p126 = por %p124, %p125
      %p127 = scmp.ne.s32.totalorder %s116, %s117
      %p128 = scmp.eq.s32.totalorder %s29, 0
      %p129 = por %p127, %p128
      %p130 = scmp.ne.s32.totalorder %s116, %s117
      %p131 = scmp.eq.s32.totalorder %s30, 1
      %p132 = por %p130, %p131
      %p134 = scmp.ne.s32.totalorder %s117, %s133
      %p135 = scmp.eq.s32.totalorder %s30, 0
      %p136 = por %p134, %p135
      %s137 = ssub.s32 %s32, %s46
      %p138 = scmp.eq.s32.totalorder %s137, 0
      %s140 = sadd.s32 %s139, 1
      %s141 = scalar_select %p138, %s139, %s140
      %p144 = pneg %p138
      %p145 = scmp.eq.s32.totalorder %s24, 1
      %p146 = por %p144, %p145
      %p147 = scmp.ne.s32.totalorder %s139, %s142
      %p148 = scmp.eq.s32.totalorder %s24, 0
      %p149 = por %p147, %p148
      %p150 = scmp.ne.s32.totalorder %s139, %s142
      %p151 = scmp.eq.s32.totalorder %s29, 1
      %p152 = por %p150, %p151
      %p153 = scmp.ne.s32.totalorder %s142, %s143
      %p154 = scmp.eq.s32.totalorder %s29, 0
      %p155 = por %p153, %p154
      %p156 = scmp.ne.s32.totalorder %s142, %s143
      %p157 = scmp.eq.s32.totalorder %s30, 1
      %p158 = por %p156, %p157
      %p160 = scmp.ne.s32.totalorder %s143, %s159
      %p161 = scmp.eq.s32.totalorder %s30, 0
      %p162 = por %p160, %p161
      %s163 = ssub.s32 %s32, %s46
      %p164 = scmp.eq.s32.totalorder %s163, 0
      %s166 = sadd.s32 %s165, 1
      %s167 = scalar_select %p164, %s165, %s166
      %p170 = pneg %p164
      %p171 = scmp.eq.s32.totalorder %s24, 1
      %p172 = por %p170, %p171
      %p173 = scmp.ne.s32.totalorder %s165, %s168
      %p174 = scmp.eq.s32.totalorder %s24, 0
      %p175 = por %p173, %p174
      %p176 = scmp.ne.s32.totalorder %s165, %s168
      %p177 = scmp.eq.s32.totalorder %s29, 1
      %p178 = por %p176, %p177
      %p179 = scmp.ne.s32.totalorder %s168, %s169
      %p180 = scmp.eq.s32.totalorder %s29, 0
      %p181 = por %p179, %p180
      %p182 = scmp.ne.s32.totalorder %s168, %s169
      %p183 = scmp.eq.s32.totalorder %s30, 1
      %p184 = por %p182, %p183
      %p186 = scmp.ne.s32.totalorder %s169, %s185
      %p187 = scmp.eq.s32.totalorder %s30, 0
      %p188 = por %p186, %p187
      %s189 = ssub.s32 %s32, %s46
      %p190 = scmp.eq.s32.totalorder %s189, 0
      %s192 = sadd.s32 %s191, 1
      %s193 = scalar_select %p190, %s191, %s192
      %p196 = pneg %p190
      %p197 = scmp.eq.s32.totalorder %s24, 1
      %p198 = por %p196, %p197
      %p199 = scmp.ne.s32.totalorder %s191, %s194
      %p200 = scmp.eq.s32.totalorder %s24, 0
      %p201 = por %p199, %p200
      %p202 = scmp.ne.s32.totalorder %s191, %s194
      %p203 = scmp.eq.s32.totalorder %s29, 1
      %p204 = por %p202, %p203
      %p205 = scmp.ne.s32.totalorder %s194, %s195
      %p206 = scmp.eq.s32.totalorder %s29, 0
      %p207 = por %p205, %p206
      %p208 = scmp.ne.s32.totalorder %s194, %s195
      %p209 = scmp.eq.s32.totalorder %s30, 1
      %p210 = por %p208, %p209
      %p212 = scmp.ne.s32.totalorder %s195, %s211
      %p213 = scmp.eq.s32.totalorder %s30, 0
      %p214 = por %p212, %p213
      %s215 = ssub.s32 %s33, %s42
      %s216 = ssub.s32 %s31, %s50
      %s217 = sor.u32 %s215, %s216
      %p218 = scmp.eq.s32.totalorder %s217, 0
      %s220 = sadd.s32 %s219, 1
      %s221 = scalar_select %p218, %s219, %s220
      %p224 = pneg %p218
      %p225 = scmp.eq.s32.totalorder %s24, 1
      %p226 = por %p224, %p225
      %p227 = scmp.ne.s32.totalorder %s219, %s222
      %p228 = scmp.eq.s32.totalorder %s24, 0
      %p229 = por %p227, %p228
      %p230 = scmp.ne.s32.totalorder %s219, %s222
      %p231 = scmp.eq.s32.totalorder %s29, 1
      %p232 = por %p230, %p231
      %p233 = scmp.ne.s32.totalorder %s222, %s223
      %p234 = scmp.eq.s32.totalorder %s29, 0
      %p235 = por %p233, %p234
      %p236 = scmp.ne.s32.totalorder %s222, %s223
      %p237 = scmp.eq.s32.totalorder %s30, 1
      %p238 = por %p236, %p237
      %p240 = scmp.ne.s32.totalorder %s223, %s239
      %p241 = scmp.eq.s32.totalorder %s30, 0
      %p242 = por %p240, %p241
      %s243 = ssub.s32 %s32, %s46
      %s244 = ssub.s32 %s31, %s50
      %s245 = sor.u32 %s243, %s244
      %p246 = scmp.eq.s32.totalorder %s245, 0
      %s248 = sadd.s32 %s247, 1
      %s249 = scalar_select %p246, %s247, %s248
      %p252 = pneg %p246
      %p253 = scmp.eq.s32.totalorder %s24, 1
      %p254 = por %p252, %p253
      %p255 = scmp.ne.s32.totalorder %s247, %s250
      %p256 = scmp.eq.s32.totalorder %s24, 0
      %p257 = por %p255, %p256
      %p258 = scmp.ne.s32.totalorder %s247, %s250
      %p259 = scmp.eq.s32.totalorder %s29, 1
      %p260 = por %p258, %p259
      %p261 = scmp.ne.s32.totalorder %s250, %s251
      %p262 = scmp.eq.s32.totalorder %s29, 0
      %p263 = por %p261, %p262
      %p264 = scmp.ne.s32.totalorder %s250, %s251
      %p265 = scmp.eq.s32.totalorder %s30, 1
      %p266 = por %p264, %p265
      %p268 = scmp.ne.s32.totalorder %s251, %s267
      %p269 = scmp.eq.s32.totalorder %s30, 0
      %p270 = por %p268, %p269
      %p271 = scmp.le.s32.totalorder 1, %s24
      %p272 = scmp.lt.s32.totalorder %s24, 3
      %p273 = pnand %p271, %p272
      %p274 = pneg %p273
      // Predicated region
      $region9: #{tpu_custom_call.1} parent=5 // pred_check
        _
      $region10: #{tpu_custom_call.1} parent=5 // pred_check_branch
        %276 = sbr.rel (%p273) target = $region12
      $region11: #{tpu_custom_call.1} parent=5 // pred_region
        %s277 = ssub.s32 %s24, 1
      $region12: #{tpu_custom_call.1} parent=5 // pred_fallthru
        _
      %p278 = scmp.lt.s32.totalorder %s24, 2
      // Predicated region
      $region13: #{tpu_custom_call.1} parent=5 // pred_check
        %p279 = pneg %p278
      $region14: #{tpu_custom_call.1} parent=5 // pred_check_branch
        %281 = sbr.rel (%p279) target = $region16
      $region15: #{tpu_custom_call.1} parent=5 // pred_region
        // Predicated region
        $region17: #{tpu_custom_call.1} parent=15 // pred_check
          %p282 = pneg %p69
        $region18: #{tpu_custom_call.1} parent=15 // pred_check_branch
          %284 = sbr.rel (%p282) target = $region20
        $region19: #{tpu_custom_call.1} parent=15 // pred_region
          %p285 = scmp.eq.s32.totalorder %s32, 0
          %s286 = scalar_select %p285, %s33, 0
          %p287 = scmp.lt.s32.totalorder %s286, 0
          %s288 = scalar_select %p287, %s286, 0
          %p289 = scmp.lt.s32.totalorder %s31, 0
          %s290 = scalar_select %p289, %s31, 0
          %s291 = sadd.s32 %s290, %s288
          %s292 = smul.addr %s291, 4
          %s293 = scalar_lea.vmem %s0, %s292
          %p294 = scmp.eq.s32.totalorder %s32, 0
          %s295 = scalar_select %p294, %s33, 0
        $region20: #{tpu_custom_call.1} parent=15 // pred_fallthru
          _
        // Predicated region
        $region21: #{tpu_custom_call.1} parent=15 // pred_check
          %p296 = pneg %p97
        $region22: #{tpu_custom_call.1} parent=15 // pred_check_branch
          %298 = sbr.rel (%p296) target = $region24
        $region23: #{tpu_custom_call.1} parent=15 // pred_region
          %s299 = sand.u32 %s87, 1
          %s300 = scalar_lea.sflag [#allocation4], %s299
          %s301 = sand.u32 %s87, 1
          %s302 = smul.addr %s301, 8
          %s303 = scalar_lea.vmem [#allocation3], %s302
          %305 = vsyncadd %s300, 0
          %s306 = sadd.s32 %s31, %s32
          %s307 = smul.addr %s306, 8
          %s308 = scalar_lea.hbm %s1, %s307
          %s310 = sshll.u32 %s308, 4
          %s311 = int_to_ptr.hbm [resolvable:$true] %s310
          %s312 = sshll.u32 %s303, 4
          %s313 = int_to_ptr.vmem [resolvable:$true] %s312
          %315 = dma.hbm_to_vmem [thread:$0]  %s311, 128, %s313, %s300
        $region24: #{tpu_custom_call.1} parent=15 // pred_fallthru
          _
        // Predicated region
        $region25: #{tpu_custom_call.1} parent=15 // pred_check
          %p316 = pneg %p123
        $region26: #{tpu_custom_call.1} parent=15 // pred_check_branch
          %318 = sbr.rel (%p316) target = $region28
        $region27: #{tpu_custom_call.1} parent=15 // pred_region
          %s319 = sand.u32 %s24, 1
          %s320 = scalar_lea.sflag [#allocation7], %s319
          %s321 = sand.u32 %s113, 1
          %s322 = smul.addr %s321, 192
          %s323 = scalar_lea.vmem [#allocation6], %s322
          %325 = vsyncadd %s320, 0
          %s326 = smul.addr %s32, 48
          %s327 = smul.addr %s326, 4
          %s328 = scalar_lea.hbm %s2, %s327
          %s329 = sshll.u32 %s328, 4
          %s330 = int_to_ptr.hbm [resolvable:$true] %s329
          %s331 = sshll.u32 %s323, 4
          %s332 = int_to_ptr.vmem [resolvable:$true] %s331
          %337 = dma.hbm_to_vmem [thread:$0]  %s330, 3072, %s332, %s320, 192, 192, 12
        $region28: #{tpu_custom_call.1} parent=15 // pred_fallthru
          _
        // Predicated region
        $region29: #{tpu_custom_call.1} parent=15 // pred_check
          %p338 = pneg %p149
        $region30: #{tpu_custom_call.1} parent=15 // pred_check_branch
          %340 = sbr.rel (%p338) target = $region32
        $region31: #{tpu_custom_call.1} parent=15 // pred_region
          %s341 = sand.u32 %s24, 1
          %s342 = scalar_lea.sflag [#allocation7], %s341
          %s343 = sand.u32 %s139, 1
          %s344 = smul.addr %s343, 192
          %s345 = scalar_lea.vmem [#allocation8], %s344
          %347 = vsyncadd %s342, 0
          %s348 = smul.addr %s32, 48
          %s349 = smul.addr %s348, 4
          %s350 = scalar_lea.hbm %s3, %s349
          %s351 = sshll.u32 %s350, 4
          %s352 = int_to_ptr.hbm [resolvable:$true] %s351
          %s353 = sshll.u32 %s345, 4
          %s354 = int_to_ptr.vmem [resolvable:$true] %s353
          %359 = dma.hbm_to_vmem [thread:$0]  %s352, 3072, %s354, %s342, 192, 192, 12
        $region32: #{tpu_custom_call.1} parent=15 // pred_fallthru
          _
        // Predicated region
        $region33: #{tpu_custom_call.1} parent=15 // pred_check
          %p360 = pneg %p175
        $region34: #{tpu_custom_call.1} parent=15 // pred_check_branch
          %362 = sbr.rel (%p360) target = $region36
        $region35: #{tpu_custom_call.1} parent=15 // pred_region
          %p363 = scmp.lt.s32.totalorder %s32, 1
          %s364 = scalar_select %p363, %s32, 1
          %s365 = smul.addr %s364, 3
          %s366 = scalar_lea.vmem %s4, %s365
        $region36: #{tpu_custom_call.1} parent=15 // pred_fallthru
          _
        // Predicated region
        $region37: #{tpu_custom_call.1} parent=15 // pred_check
          %p367 = pneg %p201
        $region38: #{tpu_custom_call.1} parent=15 // pred_check_branch
          %369 = sbr.rel (%p367) target = $region40
        $region39: #{tpu_custom_call.1} parent=15 // pred_region
          %p370 = scmp.lt.s32.totalorder %s32, 1
          %s371 = scalar_select %p370, %s32, 1
          %s372 = scalar_lea.vmem %s5, %s371
        $region40: #{tpu_custom_call.1} parent=15 // pred_fallthru
          _
      $region16: #{tpu_custom_call.1} parent=5 // pred_fallthru
        _
      %p373 = scmp.le.s32.totalorder 1, %s24
      %p374 = scmp.lt.s32.totalorder %s24, 3
      %p375 = pnand %p373, %p374
      %p376 = pneg %p375
      // Predicated region
      $region41: #{tpu_custom_call.1} parent=5 // pred_check
        _
      $region42: #{tpu_custom_call.1} parent=5 // pred_check_branch
        %378 = sbr.rel (%p375) target = $region44
      $region43: #{tpu_custom_call.1} parent=5 // pred_region
        %s379 = ssub.s32 %s24, 1
        %s380 = sand.u32 %s90, 1
        %s381 = scalar_lea.sflag [#allocation4], %s380
        %s382 = sand.u32 %s90, 1
        %s383 = smul.addr %s382, 8
        %s384 = scalar_lea.vmem [#allocation3], %s383
        // Predicated region
        $region45: #{tpu_custom_call.1} parent=43 // pred_check
          %p385 = pneg %p103
        $region46: #{tpu_custom_call.1} parent=43 // pred_check_branch
          %387 = sbr.rel (%p385) target = $region48
        $region47: #{tpu_custom_call.1} parent=43 // pred_region
          %389 = dma.done %s381, 128
        $region48: #{tpu_custom_call.1} parent=43 // pred_fallthru
          _
        %s390 = sand.u32 %s29, 1
        %s391 = scalar_lea.sflag [#allocation7], %s390
        %s392 = sand.u32 %s116, 1
        %s393 = smul.addr %s392, 192
        %s394 = scalar_lea.vmem [#allocation6], %s393
        // Predicated region
        $region49: #{tpu_custom_call.1} parent=43 // pred_check
          %p395 = pneg %p129
        $region50: #{tpu_custom_call.1} parent=43 // pred_check_branch
          %397 = sbr.rel (%p395) target = $region52
        $region51: #{tpu_custom_call.1} parent=43 // pred_region
          %399 = dma.done %s391, 3072
        $region52: #{tpu_custom_call.1} parent=43 // pred_fallthru
          _
        %s400 = sand.u32 %s29, 1
        %s401 = scalar_lea.sflag [#allocation7], %s400
        %s402 = sand.u32 %s142, 1
        %s403 = smul.addr %s402, 192
        %s404 = scalar_lea.vmem [#allocation8], %s403
        // Predicated region
        $region53: #{tpu_custom_call.1} parent=43 // pred_check
          %p405 = pneg %p155
        $region54: #{tpu_custom_call.1} parent=43 // pred_check_branch
          %407 = sbr.rel (%p405) target = $region56
        $region55: #{tpu_custom_call.1} parent=43 // pred_region
          %409 = dma.done %s401, 3072
        $region56: #{tpu_custom_call.1} parent=43 // pred_fallthru
          _
        %p410 = scmp.eq.s32.totalorder %s35, 0
        %s411 = scalar_select %p410, %s36, 0
        %p412 = scmp.lt.s32.totalorder %s411, 0
        %s413 = scalar_select %p412, %s411, 0
        %p414 = scmp.lt.s32.totalorder %s34, 0
        %s415 = scalar_select %p414, %s34, 0
        %s416 = sadd.s32 %s415, %s413
        %s417 = smul.addr %s416, 4
        %s418 = scalar_lea.vmem %s0, %s417
        %p419 = pneg %p75
        %p420 = pneg %p72
        %s421 = sand.u32 %s90, 1
        %s422 = scalar_lea.sflag [#allocation4], %s421
        %s423 = sand.u32 %s90, 1
        %s424 = smul.addr %s423, 8
        %s425 = scalar_lea.vmem [#allocation3], %s424
        %p426 = pneg %p103
        %p427 = pneg %p100
        %s428 = sand.u32 %s29, 1
        %s429 = scalar_lea.sflag [#allocation7], %s428
        %s430 = sand.u32 %s116, 1
        %s431 = smul.addr %s430, 192
        %s432 = scalar_lea.vmem [#allocation6], %s431
        %p433 = pneg %p129
        %p434 = pneg %p126
        %s435 = sand.u32 %s29, 1
        %s436 = scalar_lea.sflag [#allocation7], %s435
        %s437 = sand.u32 %s142, 1
        %s438 = smul.addr %s437, 192
        %s439 = scalar_lea.vmem [#allocation8], %s438
        %p440 = pneg %p155
        %p441 = pneg %p152
        %p442 = scmp.lt.s32.totalorder %s35, 1
        %s443 = scalar_select %p442, %s35, 1
        %s444 = smul.addr %s443, 3
        %s445 = scalar_lea.vmem %s4, %s444
        %p446 = pneg %p181
        %p447 = pneg %p178
        %p448 = scmp.lt.s32.totalorder %s35, 1
        %s449 = scalar_select %p448, %s35, 1
        %s450 = scalar_lea.vmem %s5, %s449
        %p451 = pneg %p207
        %p452 = pneg %p204
        %p453 = pneg %p235
        %p454 = pneg %p232
        %p455 = pneg %p263
        %p456 = pneg %p260
        %s457 = sand.u32 %s250, 1
        %s458 = scalar_lea.sflag [#allocation11], %s457
        %s459 = sand.u32 %s250, 1
        %s460 = smul.addr %s459, 8
        %s461 = scalar_lea.vmem [#allocation10], %s460
        %p462 = scmp.eq.s32.totalorder %s35, 0
        %s463 = scalar_select %p462, %s36, 0
        %p464 = scmp.lt.s32.totalorder %s463, 0
        %s465 = scalar_select %p464, %s463, 0
        %p466 = scmp.lt.s32.totalorder %s34, 0
        %s467 = scalar_select %p466, %s34, 0
        %s468 = sadd.s32 %s467, %s465
        %s469 = smul.addr %s468, 4
        %s470 = scalar_lea.vmem %s0, %s469
        %p471 = scmp.eq.s32.totalorder %s35, 0
        %s472 = scalar_select %p471, %s36, 0
        %p473 = scmp.lt.s32.totalorder %s35, 1
        %s474 = scalar_select %p473, %s35, 1
        %s475 = smul.addr %s474, 3
        %s476 = scalar_lea.vmem %s4, %s475
        %p477 = scmp.lt.s32.totalorder %s35, 1
        %s478 = scalar_select %p477, %s35, 1
        %s479 = scalar_lea.vmem %s5, %s478
        %p480 = scmp.eq.s32.totalorder %s36, 0
        // Predicated region
        $region57: #{tpu_custom_call.1} parent=43 // pred_check
          %p481 = pneg %p480
        $region58: #{tpu_custom_call.1} parent=43 // pred_check_branch
          %483 = sbr.rel (%p481) target = $region60
        $region59: #{tpu_custom_call.1} parent=43 // pred_region
          %v484 = vld [vmem:[%s384] sm:$0xff]
          %485 = vst [vmem:[%s461] sm:$0xff] %v484
        $region60: #{tpu_custom_call.1} parent=43 // pred_fallthru
          _
        %p486 = scmp.eq.s32.totalorder %s35, 0
        // Predicated region
        $region61: #{tpu_custom_call.1} parent=43 // pred_check
          %p487 = pneg %p486
        $region62: #{tpu_custom_call.1} parent=43 // pred_check_branch
          %489 = sbr.rel (%p487) target = $region64
        $region63: #{tpu_custom_call.1} parent=43 // pred_region
          %v490 = vld [vmem:[%s470] sm:$0xf]
          %s491 = smul.addr %s36, 4
          %s492 = scalar_lea.vmem [#allocation2], %s491
          %493 = vst [vmem:[%s492] sm:$0xf] %v490
        $region64: #{tpu_custom_call.1} parent=43 // pred_fallthru
          _
        %s494 = smul.addr %s36, 4
        %s495 = scalar_lea.vmem [#allocation2], %s494
        %v496 = vld [vmem:[%s495] sm:$0xf]
        %v497 = vld [vmem:[%s461] sm:$0xff]
        %v498 = vld [vmem:[%s394] sm:$0xff]
        %v499 = vld [vmem:[%s394 + $0x8] sm:$0xf]
        %v500 = vld [vmem:[%s394 + $0xc] sm:$0xff]
        %v501 = vld [vmem:[%s394 + $0x14] sm:$0xf]
        %v502 = vld [vmem:[%s394 + $0x18] sm:$0xff]
        %v503 = vld [vmem:[%s394 + $0x20] sm:$0xf]
        %v504 = vld [vmem:[%s394 + $0x24] sm:$0xff]
        %v505 = vld [vmem:[%s394 + $0x2c] sm:$0xf]
        %v506 = vld [vmem:[%s394 + $0x30] sm:$0xff]
        %v507 = vld [vmem:[%s394 + $0x38] sm:$0xf]
        %v508 = vld [vmem:[%s394 + $0x3c] sm:$0xff]
        %v509 = vld [vmem:[%s394 + $0x44] sm:$0xf]
        %v510 = vld [vmem:[%s394 + $0x48] sm:$0xff]
        %v511 = vld [vmem:[%s394 + $0x50] sm:$0xf]
        %v512 = vld [vmem:[%s394 + $0x54] sm:$0xff]
        %v513 = vld [vmem:[%s394 + $0x5c] sm:$0xf]
        %v514 = vld [vmem:[%s394 + $0x60] sm:$0xff]
        %v515 = vld [vmem:[%s394 + $0x68] sm:$0xf]
        %v516 = vld [vmem:[%s394 + $0x6c] sm:$0xff]
        %v517 = vld [vmem:[%s394 + $0x74] sm:$0xf]
        %v518 = vld [vmem:[%s394 + $0x78] sm:$0xff]
        %v519 = vld [vmem:[%s394 + $0x80] sm:$0xf]
        %v520 = vld [vmem:[%s394 + $0x84] sm:$0xff]
        %v521 = vld [vmem:[%s394 + $0x8c] sm:$0xf]
        %v522 = vld [vmem:[%s394 + $0x90] sm:$0xff]
        %v523 = vld [vmem:[%s394 + $0x98] sm:$0xf]
        %v524 = vld [vmem:[%s394 + $0x9c] sm:$0xff]
        %v525 = vld [vmem:[%s394 + $0xa4] sm:$0xf]
        %v526 = vld [vmem:[%s394 + $0xa8] sm:$0xff]
        %v527 = vld [vmem:[%s394 + $0xb0] sm:$0xf]
        %v528 = vld [vmem:[%s394 + $0xb4] sm:$0xff]
        %v529 = vld [vmem:[%s394 + $0xbc] sm:$0xf]
        %v530 = vld [vmem:[%s476] sm:$0x7]
        %v532 = vperm.slane %v530, 0
        %v533 = vperm.slane %v530, 1
        %v534 = vperm.slane %v530, 2
        %v570 = vunpack.c.l.b16 %v498
        %v571 = vunpack.c.h.b16 %v498
        %v572 = vunpack.c.l.b16 %v499
        %v573 = vunpack.c.l.b16 %v500
        %v574 = vunpack.c.h.b16 %v500
        %v575 = vunpack.c.l.b16 %v501
        %v576 = vunpack.c.l.b16 %v502
        %v577 = vunpack.c.h.b16 %v502
        %v578 = vunpack.c.l.b16 %v503
        %v579 = vunpack.c.l.b16 %v504
        %v580 = vunpack.c.h.b16 %v504
        %v581 = vunpack.c.l.b16 %v505
        %v582 = vunpack.c.l.b16 %v506
        %v583 = vunpack.c.h.b16 %v506
        %v584 = vunpack.c.l.b16 %v507
        %v585 = vunpack.c.l.b16 %v508
        %v586 = vunpack.c.h.b16 %v508
        %v587 = vunpack.c.l.b16 %v509
        %v588 = vunpack.c.l.b16 %v510
        %v589 = vunpack.c.h.b16 %v510
        %v590 = vunpack.c.l.b16 %v511
        %v591 = vunpack.c.l.b16 %v512
        %v592 = vunpack.c.h.b16 %v512
        %v593 = vunpack.c.l.b16 %v513
        %v594 = vunpack.c.l.b16 %v514
        %v595 = vunpack.c.h.b16 %v514
        %v596 = vunpack.c.l.b16 %v515
        %v597 = vunpack.c.l.b16 %v516
        %v598 = vunpack.c.h.b16 %v516
        %v599 = vunpack.c.l.b16 %v517
        %v600 = vunpack.c.l.b16 %v518
        %v601 = vunpack.c.h.b16 %v518
        %v602 = vunpack.c.l.b16 %v519
        %v603 = vunpack.c.l.b16 %v520
        %v604 = vunpack.c.h.b16 %v520
        %v605 = vunpack.c.l.b16 %v521
        %v606 = vunpack.c.l.b16 %v522
        %v607 = vunpack.c.h.b16 %v522
        %v608 = vunpack.c.l.b16 %v523
        %v609 = vunpack.c.l.b16 %v524
        %v610 = vunpack.c.h.b16 %v524
        %v611 = vunpack.c.l.b16 %v525
        %v612 = vunpack.c.l.b16 %v526
        %v613 = vunpack.c.h.b16 %v526
        %v614 = vunpack.c.l.b16 %v527
        %v615 = vunpack.c.l.b16 %v528
        %v616 = vunpack.c.h.b16 %v528
        %v617 = vunpack.c.l.b16 %v529
        %v618 = vpack.c.b16 %v573, %v570
        %v619 = vpack.c.b16 %v574, %v571
        %v620 = vpack.c.b16 %v575, %v572
        %v621 = vpack.c.b16 %v579, %v576
        %v622 = vpack.c.b16 %v580, %v577
        %v623 = vpack.c.b16 %v581, %v578
        %v624 = vpack.c.b16 %v585, %v582
        %v625 = vpack.c.b16 %v586, %v583
        %v626 = vpack.c.b16 %v587, %v584
        %v627 = vpack.c.b16 %v591, %v588
        %v628 = vpack.c.b16 %v592, %v589
        %v629 = vpack.c.b16 %v593, %v590
        %v630 = vpack.c.b16 %v597, %v594
        %v631 = vpack.c.b16 %v598, %v595
        %v632 = vpack.c.b16 %v599, %v596
        %v633 = vpack.c.b16 %v603, %v600
        %v634 = vpack.c.b16 %v604, %v601
        %v635 = vpack.c.b16 %v605, %v602
        %v636 = vpack.c.b16 %v609, %v606
        %v637 = vpack.c.b16 %v610, %v607
        %v638 = vpack.c.b16 %v611, %v608
        %v639 = vpack.c.b16 %v615, %v612
        %v640 = vpack.c.b16 %v616, %v613
        %v641 = vpack.c.b16 %v617, %v614
        %666 = vmatpush.bf16.msra.mxu0 %v639
        %667 = vmatpush.bf16.msra.mxu0 %v636
        %668 = vmatpush.bf16.msra.mxu0 %v633
        %669 = vmatpush.bf16.msra.mxu0 %v630
        %670 = vmatpush.bf16.msra.mxu0 %v627
        %671 = vmatpush.bf16.msra.mxu0 %v624
        %672 = vmatpush.bf16.msra.mxu0 %v621
        %673 = vmatpush.bf16.msra.mxu0 %v618
        %674 = vmatmul.bf16.gmra.mxu0 %v496
        %v675 = vpop.f32.mrf.mxu0
        %v676 = vadd.f32 %v532, %v675
        %v677 = vpop.f32.mrf.mxu0
        %678 = vdwg.mxu0
        %679 = vmatpush.bf16.msra.mxu0 %v640
        %680 = vmatpush.bf16.msra.mxu0 %v637
        %681 = vmatpush.bf16.msra.mxu0 %v634
        %682 = vmatpush.bf16.msra.mxu0 %v631
        %683 = vmatpush.bf16.msra.mxu0 %v628
        %684 = vmatpush.bf16.msra.mxu0 %v625
        %685 = vmatpush.bf16.msra.mxu0 %v622
        %686 = vmatpush.bf16.msra.mxu0 %v619
        %687 = vmatmul.bf16.gmra.mxu0 %v496
        %v688 = vpop.f32.mrf.mxu0
        %v689 = vadd.f32 %v533, %v688
        %v690 = vpop.f32.mrf.mxu0
        %691 = vdwg.mxu0
        %692 = vmatpush.bf16.msra.mxu0 %v641
        %693 = vmatpush.bf16.msra.mxu0 %v638
        %694 = vmatpush.bf16.msra.mxu0 %v635
        %695 = vmatpush.bf16.msra.mxu0 %v632
        %696 = vmatpush.bf16.msra.mxu0 %v629
        %697 = vmatpush.bf16.msra.mxu0 %v626
        %698 = vmatpush.bf16.msra.mxu0 %v623
        %699 = vmatpush.bf16.msra.mxu0 %v620
        %700 = vmatmul.bf16.gmra.mxu0 %v496
        %v701 = vpop.f32.mrf.mxu0
        %v702 = vadd.f32 %v534, %v701
        %v703 = vpop.f32.mrf.mxu0
        %704 = vdwg.mxu0
        %v705 = vpack.c.bf16 %v497, %v497
        %v706 = vld [vmem:[%s404] sm:$0xff]
        %v707 = vld [vmem:[%s404 + $0x8] sm:$0xf]
        %v708 = vld [vmem:[%s404 + $0xc] sm:$0xff]
        %v709 = vld [vmem:[%s404 + $0x14] sm:$0xf]
        %v710 = vld [vmem:[%s404 + $0x18] sm:$0xff]
        %v711 = vld [vmem:[%s404 + $0x20] sm:$0xf]
        %v712 = vld [vmem:[%s404 + $0x24] sm:$0xff]
        %v713 = vld [vmem:[%s404 + $0x2c] sm:$0xf]
        %v714 = vld [vmem:[%s404 + $0x30] sm:$0xff]
        %v715 = vld [vmem:[%s404 + $0x38] sm:$0xf]
        %v716 = vld [vmem:[%s404 + $0x3c] sm:$0xff]
        %v717 = vld [vmem:[%s404 + $0x44] sm:$0xf]
        %v718 = vld [vmem:[%s404 + $0x48] sm:$0xff]
        %v719 = vld [vmem:[%s404 + $0x50] sm:$0xf]
        %v720 = vld [vmem:[%s404 + $0x54] sm:$0xff]
        %v721 = vld [vmem:[%s404 + $0x5c] sm:$0xf]
        %v722 = vld [vmem:[%s404 + $0x60] sm:$0xff]
        %v723 = vld [vmem:[%s404 + $0x68] sm:$0xf]
        %v724 = vld [vmem:[%s404 + $0x6c] sm:$0xff]
        %v725 = vld [vmem:[%s404 + $0x74] sm:$0xf]
        %v726 = vld [vmem:[%s404 + $0x78] sm:$0xff]
        %v727 = vld [vmem:[%s404 + $0x80] sm:$0xf]
        %v728 = vld [vmem:[%s404 + $0x84] sm:$0xff]
        %v729 = vld [vmem:[%s404 + $0x8c] sm:$0xf]
        %v730 = vld [vmem:[%s404 + $0x90] sm:$0xff]
        %v731 = vld [vmem:[%s404 + $0x98] sm:$0xf]
        %v732 = vld [vmem:[%s404 + $0x9c] sm:$0xff]
        %v733 = vld [vmem:[%s404 + $0xa4] sm:$0xf]
        %v734 = vld [vmem:[%s404 + $0xa8] sm:$0xff]
        %v735 = vld [vmem:[%s404 + $0xb0] sm:$0xf]
        %v736 = vld [vmem:[%s404 + $0xb4] sm:$0xff]
        %v737 = vld [vmem:[%s404 + $0xbc] sm:$0xf]
        %v770 = vunpack.c.l.b16 %v706
        %v771 = vunpack.c.h.b16 %v706
        %v772 = vunpack.c.l.b16 %v707
        %v773 = vunpack.c.l.b16 %v708
        %v774 = vunpack.c.h.b16 %v708
        %v775 = vunpack.c.l.b16 %v709
        %v776 = vunpack.c.l.b16 %v710
        %v777 = vunpack.c.h.b16 %v710
        %v778 = vunpack.c.l.b16 %v711
        %v779 = vunpack.c.l.b16 %v712
        %v780 = vunpack.c.h.b16 %v712
        %v781 = vunpack.c.l.b16 %v713
        %v782 = vunpack.c.l.b16 %v714
        %v783 = vunpack.c.h.b16 %v714
        %v784 = vunpack.c.l.b16 %v715
        %v785 = vunpack.c.l.b16 %v716
        %v786 = vunpack.c.h.b16 %v716
        %v787 = vunpack.c.l.b16 %v717
        %v788 = vunpack.c.l.b16 %v718
        %v789 = vunpack.c.h.b16 %v718
        %v790 = vunpack.c.l.b16 %v719
        %v791 = vunpack.c.l.b16 %v720
        %v792 = vunpack.c.h.b16 %v720
        %v793 = vunpack.c.l.b16 %v721
        %v794 = vunpack.c.l.b16 %v722
        %v795 = vunpack.c.h.b16 %v722
        %v796 = vunpack.c.l.b16 %v723
        %v797 = vunpack.c.l.b16 %v724
        %v798 = vunpack.c.h.b16 %v724
        %v799 = vunpack.c.l.b16 %v725
        %v800 = vunpack.c.l.b16 %v726
        %v801 = vunpack.c.h.b16 %v726
        %v802 = vunpack.c.l.b16 %v727
        %v803 = vunpack.c.l.b16 %v728
        %v804 = vunpack.c.h.b16 %v728
        %v805 = vunpack.c.l.b16 %v729
        %v806 = vunpack.c.l.b16 %v730
        %v807 = vunpack.c.h.b16 %v730
        %v808 = vunpack.c.l.b16 %v731
        %v809 = vunpack.c.l.b16 %v732
        %v810 = vunpack.c.h.b16 %v732
        %v811 = vunpack.c.l.b16 %v733
        %v812 = vunpack.c.l.b16 %v734
        %v813 = vunpack.c.h.b16 %v734
        %v814 = vunpack.c.l.b16 %v735
        %v815 = vunpack.c.l.b16 %v736
        %v816 = vunpack.c.h.b16 %v736
        %v817 = vunpack.c.l.b16 %v737
        %v818 = vpack.c.b16 %v773, %v770
        %v819 = vpack.c.b16 %v774, %v771
        %v820 = vpack.c.b16 %v775, %v772
        %v821 = vpack.c.b16 %v779, %v776
        %v822 = vpack.c.b16 %v780, %v777
        %v823 = vpack.c.b16 %v781, %v778
        %v824 = vpack.c.b16 %v785, %v782
        %v825 = vpack.c.b16 %v786, %v783
        %v826 = vpack.c.b16 %v787, %v784
        %v827 = vpack.c.b16 %v791, %v788
        %v828 = vpack.c.b16 %v792, %v789
        %v829 = vpack.c.b16 %v793, %v790
        %v830 = vpack.c.b16 %v797, %v794
        %v831 = vpack.c.b16 %v798, %v795
        %v832 = vpack.c.b16 %v799, %v796
        %v833 = vpack.c.b16 %v803, %v800
        %v834 = vpack.c.b16 %v804, %v801
        %v835 = vpack.c.b16 %v805, %v802
        %v836 = vpack.c.b16 %v809, %v806
        %v837 = vpack.c.b16 %v810, %v807
        %v838 = vpack.c.b16 %v811, %v808
        %v839 = vpack.c.b16 %v815, %v812
        %v840 = vpack.c.b16 %v816, %v813
        %v841 = vpack.c.b16 %v817, %v814
        %866 = vmatpush.bf16.msra.mxu0 %v839
        %867 = vmatpush.bf16.msra.mxu0 %v836
        %868 = vmatpush.bf16.msra.mxu0 %v833
        %869 = vmatpush.bf16.msra.mxu0 %v830
        %870 = vmatpush.bf16.msra.mxu0 %v827
        %871 = vmatpush.bf16.msra.mxu0 %v824
        %872 = vmatpush.bf16.msra.mxu0 %v821
        %873 = vmatpush.bf16.msra.mxu0 %v818
        %874 = vmatmul.bf16.gmra.mxu0 %v705
        %v875 = vpop.f32.mrf.mxu0
        %v876 = vadd.f32 0.0, %v875
        %v877 = vpop.f32.mrf.mxu0
        %878 = vdwg.mxu0
        %879 = vmatpush.bf16.msra.mxu0 %v840
        %880 = vmatpush.bf16.msra.mxu0 %v837
        %881 = vmatpush.bf16.msra.mxu0 %v834
        %882 = vmatpush.bf16.msra.mxu0 %v831
        %883 = vmatpush.bf16.msra.mxu0 %v828
        %884 = vmatpush.bf16.msra.mxu0 %v825
        %885 = vmatpush.bf16.msra.mxu0 %v822
        %886 = vmatpush.bf16.msra.mxu0 %v819
        %887 = vmatmul.bf16.gmra.mxu0 %v705
        %v888 = vpop.f32.mrf.mxu0
        %v889 = vadd.f32 0.0, %v888
        %v890 = vpop.f32.mrf.mxu0
        %891 = vdwg.mxu0
        %892 = vmatpush.bf16.msra.mxu0 %v841
        %893 = vmatpush.bf16.msra.mxu0 %v838
        %894 = vmatpush.bf16.msra.mxu0 %v835
        %895 = vmatpush.bf16.msra.mxu0 %v832
        %896 = vmatpush.bf16.msra.mxu0 %v829
        %897 = vmatpush.bf16.msra.mxu0 %v826
        %898 = vmatpush.bf16.msra.mxu0 %v823
        %899 = vmatpush.bf16.msra.mxu0 %v820
        %900 = vmatmul.bf16.gmra.mxu0 %v705
        %v901 = vpop.f32.mrf.mxu0
        %v902 = vadd.f32 0.0, %v901
        %v903 = vpop.f32.mrf.mxu0
        %904 = vdwg.mxu0
        %v905 = vadd.f32 %v676, %v876
        %v906 = vxor.u32 %v905, 2147483648
        %v907 = vmul.f32 %v906, 1.442695
        %v908 = vpow.pop %v907
        %v909 = vadd.f32 %v908, 1.0
        %v910 = vrcp.pop %v909
        %v911 = vmul.f32 %v909, %v910
        %v912 = vsub.f32 1.0, %v911
        %v913 = vmul.f32 %v910, %v912
        %v914 = vadd.f32 %v910, %v913
        %vm915 = vweird.f32 %v909
        %vm916 = vweird.f32 %v910
        %vm917 = vmor %vm915, %vm916
        %v918 = vsel %vm917, %v910, %v914
        %v919 = vand.u32 2147483647, %v909
        %vm920 = vcmp.eq.f32.partialorder %v919, 8.507059e+37
        %v921 = vand.u32 %v909, 2147483648
        %v922 = vor.u32 1.1754944e-38, %v921
        %v923 = vsel %vm920, %v922, %v918
        %v924 = vmul.f32 1.0, %v923
        %v925 = vadd.f32 %v689, %v889
        %v926 = vxor.u32 %v925, 2147483648
        %v927 = vmul.f32 %v926, 1.442695
        %v928 = vpow.pop %v927
        %v929 = vadd.f32 %v928, 1.0
        %v930 = vrcp.pop %v929
        %v931 = vmul.f32 %v929, %v930
        %v932 = vsub.f32 1.0, %v931
        %v933 = vmul.f32 %v930, %v932
        %v934 = vadd.f32 %v930, %v933
        %vm935 = vweird.f32 %v929
        %vm936 = vweird.f32 %v930
        %vm937 = vmor %vm935, %vm936
        %v938 = vsel %vm937, %v930, %v934
        %v939 = vand.u32 2147483647, %v929
        %vm940 = vcmp.eq.f32.partialorder %v939, 8.507059e+37
        %v941 = vand.u32 %v929, 2147483648
        %v942 = vor.u32 1.1754944e-38, %v941
        %v943 = vsel %vm940, %v942, %v938
        %v944 = vmul.f32 1.0, %v943
        %v945 = vld [vmem:[%s479] sm:$0x1]
        %v947 = vperm.slane %v945, 0
        %v949 = vadd.f32 %v902, %v947
        %v950 = vmul.f32 %v924, %v949
        %v951 = vadd.f32 %v702, %v950
        %v952 = vtanh.pop %v951
        %v953 = vsub.f32 1.0, %v944
        %v954 = vmul.f32 %v953, %v952
        %v955 = vmul.f32 %v944, %v497
        %v956 = vadd.f32 %v954, %v955
        %957 = vst [vmem:[%s461] sm:$0xff] %v956
        %958 = vst [vmem:[#allocation9] sm:$0xff] %v956
        %s959 = sadd.s32 %s35, 1
        %p960 = scmp.lt.s32.totalorder %s959, 2
        // Predicated region
        $region65: #{tpu_custom_call.1} parent=43 // pred_check
          %p961 = pneg %p960
        $region66: #{tpu_custom_call.1} parent=43 // pred_check_branch
          %963 = sbr.rel (%p961) target = $region68
        $region67: #{tpu_custom_call.1} parent=43 // pred_region
          %v964 = vpack.c.bf16 %v956, %v956
          %965 = vst [vmem:[%s495] sm:$0xf] %v964
        $region68: #{tpu_custom_call.1} parent=43 // pred_fallthru
          _
        %s966 = sand.u32 %s250, 1
        %s967 = scalar_lea.sflag [#allocation11], %s966
        %s968 = sand.u32 %s250, 1
        %s969 = smul.addr %s968, 8
        %s970 = scalar_lea.vmem [#allocation10], %s969
        // Predicated region
        $region69: #{tpu_custom_call.1} parent=43 // pred_check
          %p971 = pneg %p232
        $region70: #{tpu_custom_call.1} parent=43 // pred_check_branch
          %973 = sbr.rel (%p971) target = $region72
        $region71: #{tpu_custom_call.1} parent=43 // pred_region
          %975 = vsyncadd [#allocation5], 0
          %s976 = sadd.s32 %s34, %s36
          %s977 = smul.addr %s976, 8
          %s978 = scalar_lea.hbm %s6, %s977
          %s980 = sshll.u32 [#allocation9], 4
          %s981 = int_to_ptr.vmem [resolvable:$true] %s980
          %s982 = sshll.u32 %s978, 4
          %s983 = int_to_ptr.hbm [resolvable:$true] %s982
          %985 = dma.vmem_to_hbm [thread:$0]  %s981, 128, %s983, [#allocation5]
        $region72: #{tpu_custom_call.1} parent=43 // pred_fallthru
          _
        // Predicated region
        $region73: #{tpu_custom_call.1} parent=43 // pred_check
          %p986 = pneg %p260
        $region74: #{tpu_custom_call.1} parent=43 // pred_check_branch
          %988 = sbr.rel (%p986) target = $region76
        $region75: #{tpu_custom_call.1} parent=43 // pred_region
          %990 = vsyncadd %s967, 0
          %s991 = sadd.s32 %s34, %s35
          %s992 = smul.addr %s991, 8
          %s993 = scalar_lea.hbm %s7, %s992
          %s995 = sshll.u32 %s970, 4
          %s996 = int_to_ptr.vmem [resolvable:$true] %s995
          %s997 = sshll.u32 %s993, 4
          %s998 = int_to_ptr.hbm [resolvable:$true] %s997
          %1000 = dma.vmem_to_hbm [thread:$0]  %s996, 128, %s998, %s967
        $region76: #{tpu_custom_call.1} parent=43 // pred_fallthru
          _
        // Predicated region
        $region77: #{tpu_custom_call.1} parent=43 // pred_check
          %p1001 = pneg %p232
        $region78: #{tpu_custom_call.1} parent=43 // pred_check_branch
          %1003 = sbr.rel (%p1001) target = $region80
        $region79: #{tpu_custom_call.1} parent=43 // pred_region
          %1005 = dma.done [#allocation5], 128
        $region80: #{tpu_custom_call.1} parent=43 // pred_fallthru
          _
      $region44: #{tpu_custom_call.1} parent=5 // pred_fallthru
        _
      %p1006 = scmp.le.s32.totalorder 2, %s24
      // Predicated region
      $region81: #{tpu_custom_call.1} parent=5 // pred_check
        %p1007 = pneg %p1006
      $region82: #{tpu_custom_call.1} parent=5 // pred_check_branch
        %1009 = sbr.rel (%p1007) target = $region84
      $region83: #{tpu_custom_call.1} parent=5 // pred_region
        %s1010 = ssub.s32 %s24, 2
        // Predicated region
        $region85: #{tpu_custom_call.1} parent=83 // pred_check
          %p1011 = pneg %p266
        $region86: #{tpu_custom_call.1} parent=83 // pred_check_branch
          %1013 = sbr.rel (%p1011) target = $region88
        $region87: #{tpu_custom_call.1} parent=83 // pred_region
          %s1014 = sand.u32 %s251, 1
          %s1015 = scalar_lea.sflag [#allocation11], %s1014
          %s1016 = sand.u32 %s251, 1
          %s1017 = smul.addr %s1016, 8
          %s1018 = scalar_lea.vmem [#allocation10], %s1017
          %1020 = dma.done %s1015, 128
        $region88: #{tpu_custom_call.1} parent=83 // pred_fallthru
          _
      $region84: #{tpu_custom_call.1} parent=5 // pred_fallthru
        _
    $region6: #{tpu_custom_call.1} parent=1 // loop_footer
      %s28 = sadd.s32 1, %s24
    $region7: #{tpu_custom_call.1} parent=1 // loop_footer_branch
      %23 = sbr.rel target = $region3
    $region8: #{tpu_custom_call.1} parent=1 // loop_exit
      _
    %1021 = vsyncpa [#allocation4], 1
    %s1022 = scalar_lea.sflag [#allocation4], 1
    %1023 = vsyncpa %s1022, 1
    %1024 = vsyncpa [#allocation7], 1
    %s1025 = scalar_lea.sflag [#allocation7], 1
    %1026 = vsyncpa %s1025, 1
    %1027 = vsyncpa [#allocation5], 1
    %s1028 = scalar_lea.sflag [#allocation5], 1
    %1029 = vsyncpa %s1028, 1
    %1030 = vsyncpa [#allocation11], 1
    %s1031 = scalar_lea.sflag [#allocation11], 1
    %1032 = vsyncpa %s1031, 1

</llo_original>
